<compile_context>
chip_gen: v7x
topology: tpu7x:2x2x1
jax: 0.10.0
libtpu: 0.0.40
codegen_flags: <defaults>
</compile_context>

<pallas_src>
import jax
import jax.numpy as jnp
from jax import lax
from jax.experimental import pallas as pl
from jax.experimental.pallas import tpu as pltpu

_LANE = 128


def _round_up(x, m):
    return ((x + m - 1) // m) * m


def _make_kernel(hidden_dtype):
    def kernel(state_ref, w1_ref, w2_ref, bvec_ref, b3_ref, out_ref):
        # Cast the state tile to the MXU operand dtype here (cheap VPU pack
        # hidden under the matmul) instead of a wrapper astype, which would be
        # an extra full HBM read+write of (B, S).
        x = state_ref[...].astype(w1_ref.dtype)                  # (TB, S)

        bvec = bvec_ref[...]                                      # (H, 3) f32
        b1 = bvec[:, 0:1].astype(hidden_dtype)                    # (H, 1)
        b2 = bvec[:, 1:2].astype(hidden_dtype)                    # (H, 1)
        w3 = bvec[:, 2:3]                                         # (H, 1) f32

        # fc1: contract S of (H, S) with S of (TB, S) -> (H, TB).  Batch rows
        # ride the 128-wide lane axis so bias-add / ReLU use every lane.
        acc = lax.dot_general(w1_ref[...], x, (((1,), (1,)), ((), ())),
                              preferred_element_type=jnp.float32)
        h = jnp.maximum(acc.astype(hidden_dtype) + b1, 0)         # (H, TB)

        # fc2: (H, H) @ (H, TB) -> (H, TB), f32 accumulation on the MXU.
        acc = jnp.dot(w2_ref[...], h.astype(w2_ref.dtype),
                      preferred_element_type=jnp.float32)
        h = jnp.maximum(acc.astype(hidden_dtype) + b2, 0)         # (H, TB)

        # fc3 (H -> 1): VPU multiply + sublane (XLU) reduce instead of an
        # N=1 MXU matmul; result is already the lane-dense (1, TB) row.
        r = jnp.sum(h.astype(jnp.float32) * w3, axis=0, keepdims=True) + b3_ref[0]
        out_ref[...] = r.astype(out_ref.dtype)                    # unmasked vst

    return kernel


def _pallas_forward(x, w1, w2, bvec, b3, *, TB, num_tiles, B_pad, S, H,
                    hidden_dtype, vmem_limit, single_buffer_weights):
    # Constant-index weight/bias blocks stay resident in VMEM across grid
    # steps; single-buffer them so w2 (H x H) doesn't pay for two copies.
    wkw = {"pipeline_mode": pl.Buffered(1)} if single_buffer_weights else {}
    return pl.pallas_call(
        _make_kernel(hidden_dtype),
        out_shape=jax.ShapeDtypeStruct((1, B_pad), jnp.float32),
        grid_spec=pltpu.PrefetchScalarGridSpec(
            num_scalar_prefetch=0,
            grid=(num_tiles,),
            in_specs=[
                # state tile streams over the batch axis (double-buffered).
                pl.BlockSpec((TB, S), lambda i: (i, 0)),
                # weights / packed bias block: constant index -> VMEM resident.
                pl.BlockSpec((H, S), lambda i: (0, 0), **wkw),
                pl.BlockSpec((H, H), lambda i: (0, 0), **wkw),
                pl.BlockSpec((H, 3), lambda i: (0, 0), **wkw),
                # b3 as an SMEM scalar (no padded (8,128) VMEM tile / DMA).
                pl.BlockSpec(memory_space=pltpu.MemorySpace.SMEM),
            ],
            out_specs=pl.BlockSpec((1, TB), lambda i: (0, i)),
        ),
        compiler_params=pltpu.CompilerParams(
            dimension_semantics=("parallel",),
            vmem_limit_bytes=vmem_limit),
    )(x, w1, w2, bvec, b3)


def reward_model_forward(state, params, *, tile_b=2048,
                         matmul_dtype=jnp.bfloat16,
                         hidden_dtype=jnp.float32):
    """Full RewardModel MLP forward inside one Pallas kernel.

    state:  (B, S) float32
    params: PyTorch-native shapes:
            w1 (H, S), b1 (H,), w2 (H, H), b2 (H,), w3 (1, H), b3 (1,)
    returns (B,) float32  (matches PyTorch .squeeze(dim=1))

    matmul_dtype: MXU operand dtype (bf16 default; MXUs are bf16-native on
                  v5e/v6e/v7x).  Accumulation / bias / ReLU stay float32.
    hidden_dtype: dtype of the (H, TB) hidden activations for bias-add/ReLU.
                  Keep float32 on v5e (no bf16 VPU); bf16 is a VALU/vreg win
                  on v6e/v7x at a small accuracy cost.
    """
    B, S = state.shape
    H = params["w1"].shape[0]
    w_bytes = jnp.dtype(matmul_dtype).itemsize

    def vmem_budget(tb):
        state_b = 2 * tb * S * 4                 # f32 state tile, double-buffered
        inter_b = 3 * H * tb * 4                 # live f32 (H, tb) intermediates
        weight_b = 2 * (H * S + H * H) * w_bytes  # resident weights (conservative)
        small_b = 2 * H * _LANE * 4              # lane-padded (H, 3) block
        out_b = 2 * 8 * tb * 4                   # sublane-padded (1, tb) output
        return state_b + inter_b + weight_b + small_b + out_b + (2 << 20)

    if B >= 2 * _LANE:
        # Big batch: lane-aligned tiles, capped by tile_b, and guarantee >= 2
        # grid tiles so v7x's two TensorCores both get work.
        TB = _round_up(min(max(int(tile_b), _LANE), B), _LANE)
        TB = min(TB, _round_up((B + 1) // 2, _LANE))
        # Shrink while the working set would blow past ~48 MiB (v7x physical
        # VMEM is only 64 MiB per TensorCore).
        while TB > _LANE and vmem_budget(TB) > (48 << 20):
            TB = max(_LANE, _round_up(TB // 2, _LANE))
        num_tiles = pl.cdiv(B, TB)
        B_pad = num_tiles * TB
    else:
        # Tiny batch: one full-extent tile, no padding, no wrapper HBM pass.
        TB, num_tiles, B_pad = B, 1, B

    vmem_limit = int(min(max(vmem_budget(TB), 32 << 20), 64 << 20))

    # State stays in its original dtype/layout; only pad when the batch really
    # needs to be carved into lane-aligned tiles.
    x = state
    if B_pad != B:
        # NOTE: zero-padded rows produce relu(bias)-derived junk in the padded
        # output lanes; harmless because we slice [:B] below.
        x = jnp.pad(x, ((0, B_pad - B), (0, 0)))

    # Weights are reused every grid step, so pre-cast them once.
    w1 = params["w1"].astype(matmul_dtype)                      # (H, S)
    w2 = params["w2"].astype(matmul_dtype)                      # (H, H)
    bvec = jnp.concatenate(
        [params["b1"].reshape(H, 1),
         params["b2"].reshape(H, 1),
         params["w3"].reshape(H, 1)], axis=1).astype(jnp.float32)  # (H, 3)
    b3 = params["b3"].reshape(1).astype(jnp.float32)            # SMEM scalar

    def run(single_buffer_weights):
        return _pallas_forward(
            x, w1, w2, bvec, b3, TB=TB, num_tiles=num_tiles, B_pad=B_pad,
            S=S, H=H, hidden_dtype=hidden_dtype, vmem_limit=vmem_limit,
            single_buffer_weights=single_buffer_weights)

    try:
        out = jax.block_until_ready(run(True))
    except Exception:
        # Fallback if this jax build rejects Buffered(1) constant blocks;
        # identical numerics, slightly higher VMEM use.
        out = run(False)

    # squeeze(dim=1) equivalent + drop any batch padding: (1, B_pad) -> (B,)
    return out[0, :B]


def init_params(key, state_size, hidden_size):
    """Deterministic synthetic init mirroring nn.Linear (out,in) shapes."""
    ks = jax.random.split(key, 6)

    def uinit(k, fan_in, shape):
        bound = 1.0 / jnp.sqrt(fan_in)
        return jax.random.uniform(k, shape, jnp.float32, -bound, bound)

    return {
        "w1": uinit(ks[0], state_size, (hidden_size, state_size)),
        "b1": uinit(ks[1], state_size, (hidden_size,)),
        "w2": uinit(ks[2], hidden_size, (hidden_size, hidden_size)),
        "b2": uinit(ks[3], hidden_size, (hidden_size,)),
        "w3": uinit(ks[4], hidden_size, (1, hidden_size)),
        "b3": uinit(ks[5], hidden_size, (1,)),
    }


def reward_model_reference(state, params):
    """Pure-JAX reference (PyTorch nn.Linear semantics: x @ W.T + b)."""
    h = jnp.maximum(state @ params["w1"].T + params["b1"], 0.0)
    h = jnp.maximum(h @ params["w2"].T + params["b2"], 0.0)
    r = h @ params["w3"].T + params["b3"]
    return r[:, 0]


if __name__ == "__main__":
    key = jax.random.PRNGKey(0)
    k_params, k_state = jax.random.split(key)

    batch = 8
    state_size = 16
    hidden_size = 32

    params = init_params(k_params, state_size, hidden_size)
    state = jax.random.normal(k_state, (batch, state_size), dtype=jnp.float32)

    ref = reward_model_reference(state, params)

    # Default path: bf16 MXU operands (native on every generation's MXU),
    # f32 accumulation / bias / ReLU.  Tolerance loosened for bf16 operands.
    out_bf16 = jax.block_until_ready(reward_model_forward(state, params))
    assert out_bf16.shape == (batch,), out_bf16.shape
    assert jnp.allclose(out_bf16, ref, atol=5e-2, rtol=5e-2), (out_bf16, ref)

    # f32 operand path: matches the pure-JAX / PyTorch reference tightly.
    out_f32 = jax.block_until_ready(
        reward_model_forward(state, params, matmul_dtype=jnp.float32))
    assert out_f32.shape == (batch,), out_f32.shape
    assert jnp.allclose(out_f32, ref, atol=1e-5, rtol=1e-5), (out_f32, ref)

    # Larger batch exercising the multi-tile grid (>= 2 tiles -> both v7x TCs)
    # including a ragged batch that needs lane padding.
    big_b = 640
    big_state = jax.random.normal(jax.random.PRNGKey(1), (big_b, state_size),
                                  dtype=jnp.float32)
    big_ref = reward_model_reference(big_state, params)
    big_out = jax.block_until_ready(
        reward_model_forward(big_state, params, matmul_dtype=jnp.float32))
    assert big_out.shape == (big_b,), big_out.shape
    assert jnp.allclose(big_out, big_ref, atol=1e-4, rtol=1e-4)

    print("KERNEL_OK")
</pallas_src>

<mosaic_0001>
module attributes {stable_mosaic.version = 11 : i64} {
  func.func @kernel(%arg0: i32, %arg1: memref<8x16xf32, #tpu.memory_space<vmem>>, %arg2: memref<32x16xbf16, #tpu.memory_space<vmem>>, %arg3: memref<32x32xbf16, #tpu.memory_space<vmem>>, %arg4: memref<32x3xf32, #tpu.memory_space<vmem>>, %arg5: memref<1xf32, #tpu.memory_space<smem>>, %arg6: memref<1x8xf32, #tpu.memory_space<vmem>>) attributes {dimension_semantics = [#tpu.dimension_semantics<parallel>], iteration_bounds = array<i64: 1>, scalar_prefetch = 0 : i64, scratch_operands = 0 : i64, tpu.core_type = #tpu.core_type<tc>, window_params = [{transform_indices = @transform_0, window_bounds = array<i64: 8, 16>}, {pipeline_mode = #tpu.pipeline_mode<synchronous>, transform_indices = @transform_1, window_bounds = array<i64: 32, 16>}, {pipeline_mode = #tpu.pipeline_mode<synchronous>, transform_indices = @transform_2, window_bounds = array<i64: 32, 32>}, {pipeline_mode = #tpu.pipeline_mode<synchronous>, transform_indices = @transform_3, window_bounds = array<i64: 32, 3>}, {transform_indices = @transform_4, window_bounds = array<i64: 1>}, {transform_indices = @transform_5, window_bounds = array<i64: 1, 8>}]} {
    %c0 = arith.constant 0 : index
    %c0_0 = arith.constant 0 : index
    %0 = vector.load %arg1[%c0, %c0_0] : memref<8x16xf32, #tpu.memory_space<vmem>>, vector<8x16xf32>
    %1 = arith.truncf %0 : vector<8x16xf32> to vector<8x16xbf16>
    %c0_1 = arith.constant 0 : index
    %c0_2 = arith.constant 0 : index
    %2 = vector.load %arg4[%c0_1, %c0_2] : memref<32x3xf32, #tpu.memory_space<vmem>>, vector<32x3xf32>
    %3 = vector.extract_strided_slice %2 {offsets = [0, 0], sizes = [32, 1], strides = [1, 1]} : vector<32x3xf32> to vector<32x1xf32>
    %4 = vector.extract_strided_slice %2 {offsets = [0, 1], sizes = [32, 1], strides = [1, 1]} : vector<32x3xf32> to vector<32x1xf32>
    %5 = vector.extract_strided_slice %2 {offsets = [0, 2], sizes = [32, 1], strides = [1, 1]} : vector<32x3xf32> to vector<32x1xf32>
    %c0_3 = arith.constant 0 : index
    %c0_4 = arith.constant 0 : index
    %6 = vector.load %arg2[%c0_3, %c0_4] : memref<32x16xbf16, #tpu.memory_space<vmem>>, vector<32x16xbf16>
    %cst = arith.constant dense<0.000000e+00> : vector<32x8xf32>
    %7 = tpu.matmul %6, %1, %cst {dimension_numbers = #tpu.dot_dimension_numbers<[1], [1], [0], [0], [0, 0, 1, 0], [], []>} : vector<32x16xbf16>, vector<8x16xbf16>, vector<32x8xf32> -> vector<32x8xf32>
    %8 = vector.broadcast %3 : vector<32x1xf32> to vector<32x8xf32>
    %9 = arith.addf %7, %8 : vector<32x8xf32>
    %cst_5 = arith.constant 0.000000e+00 : f32
    %10 = vector.broadcast %cst_5 : f32 to vector<32x8xf32>
    %11 = arith.maximumf %9, %10 : vector<32x8xf32>
    %c0_6 = arith.constant 0 : index
    %c0_7 = arith.constant 0 : index
    %12 = vector.load %arg3[%c0_6, %c0_7] : memref<32x32xbf16, #tpu.memory_space<vmem>>, vector<32x32xbf16>
    %13 = arith.truncf %11 : vector<32x8xf32> to vector<32x8xbf16>
    %cst_8 = arith.constant dense<0.000000e+00> : vector<32x8xf32>
    %14 = tpu.matmul %12, %13, %cst_8 {dimension_numbers = #tpu.dot_dimension_numbers<[1], [0], [0], [1], [0, 0, 1, 1], [], []>} : vector<32x32xbf16>, vector<32x8xbf16>, vector<32x8xf32> -> vector<32x8xf32>
    %15 = vector.broadcast %4 : vector<32x1xf32> to vector<32x8xf32>
    %16 = arith.addf %14, %15 : vector<32x8xf32>
    %cst_9 = arith.constant 0.000000e+00 : f32
    %17 = vector.broadcast %cst_9 : f32 to vector<32x8xf32>
    %18 = arith.maximumf %16, %17 : vector<32x8xf32>
    %19 = vector.broadcast %5 : vector<32x1xf32> to vector<32x8xf32>
    %20 = arith.mulf %18, %19 : vector<32x8xf32>
    %cst_10 = arith.constant dense<0.000000e+00> : vector<8xf32>
    %21 = vector.multi_reduction <add>, %20, %cst_10 [0] : vector<32x8xf32> to vector<8xf32>
    %22 = vector.shape_cast %21 : vector<8xf32> to vector<1x8xf32>
    %c0_11 = arith.constant 0 : index
    %23 = memref.load %arg5[%c0_11] : memref<1xf32, #tpu.memory_space<smem>>
    %24 = vector.broadcast %23 : f32 to vector<1x8xf32>
    %25 = arith.addf %22, %24 : vector<1x8xf32>
    %c0_12 = arith.constant 0 : index
    %c0_13 = arith.constant 0 : index
    %26 = vector.load %arg6[%c0_12, %c0_13] : memref<1x8xf32, #tpu.memory_space<vmem>>, vector<1x8xf32>
    tpu.vector_store %arg6[%c0_12, %c0_13], %25 {strides = array<i32>} : memref<1x8xf32, #tpu.memory_space<vmem>>, vector<1x8xf32>,
    return
  }
  func.func @transform_0(%arg0: i32) -> (i32, i32) {
    %c0_i32 = arith.constant 0 : i32
    %c0_i32_0 = arith.constant 0 : i32
    return %arg0, %c0_i32 : i32, i32
  }
  func.func @transform_1(%arg0: i32) -> (i32, i32) {
    %c0_i32 = arith.constant 0 : i32
    %c0_i32_0 = arith.constant 0 : i32
    %c0_i32_1 = arith.constant 0 : i32
    return %c0_i32, %c0_i32_0 : i32, i32
  }
  func.func @transform_2(%arg0: i32) -> (i32, i32) {
    %c0_i32 = arith.constant 0 : i32
    %c0_i32_0 = arith.constant 0 : i32
    %c0_i32_1 = arith.constant 0 : i32
    return %c0_i32, %c0_i32_0 : i32, i32
  }
  func.func @transform_3(%arg0: i32) -> (i32, i32) {
    %c0_i32 = arith.constant 0 : i32
    %c0_i32_0 = arith.constant 0 : i32
    %c0_i32_1 = arith.constant 0 : i32
    return %c0_i32, %c0_i32_0 : i32, i32
  }
  func.func @transform_4(%arg0: i32) -> i32 {
    %c0_i32 = arith.constant 0 : i32
    %c0_i32_0 = arith.constant 0 : i32
    return %c0_i32 : i32
  }
  func.func @transform_5(%arg0: i32) -> (i32, i32) {
    %c0_i32 = arith.constant 0 : i32
    %c0_i32_0 = arith.constant 0 : i32
    return %c0_i32, %arg0 : i32, i32
  }
}

module attributes {stable_mosaic.version = 11 : i64} {
  func.func @kernel(%arg0: i32, %arg1: memref<8x16xf32, #tpu.memory_space<vmem>>, %arg2: memref<32x16xbf16, #tpu.memory_space<vmem>>, %arg3: memref<32x32xbf16, #tpu.memory_space<vmem>>, %arg4: memref<32x3xf32, #tpu.memory_space<vmem>>, %arg5: memref<1xf32, #tpu.memory_space<smem>>, %arg6: memref<1x8xf32, #tpu.memory_space<vmem>>) attributes {dimension_semantics = [#tpu.dimension_semantics<parallel>], iteration_bounds = array<i64: 1>, scalar_prefetch = 0 : i64, scratch_operands = 0 : i64, tpu.core_type = #tpu.core_type<tc>, window_params = [{transform_indices = @transform_0, window_bounds = array<i64: 8, 16>}, {pipeline_mode = #tpu.pipeline_mode<synchronous>, transform_indices = @transform_1, window_bounds = array<i64: 32, 16>}, {pipeline_mode = #tpu.pipeline_mode<synchronous>, transform_indices = @transform_2, window_bounds = array<i64: 32, 32>}, {pipeline_mode = #tpu.pipeline_mode<synchronous>, transform_indices = @transform_3, window_bounds = array<i64: 32, 3>}, {transform_indices = @transform_4, window_bounds = array<i64: 1>}, {transform_indices = @transform_5, window_bounds = array<i64: 1, 8>}]} {
    %c0 = arith.constant 0 : index
    %c0_0 = arith.constant 0 : index
    %0 = vector.load %arg1[%c0, %c0_0] : memref<8x16xf32, #tpu.memory_space<vmem>>, vector<8x16xf32>
    %1 = arith.truncf %0 : vector<8x16xf32> to vector<8x16xbf16>
    %c0_1 = arith.constant 0 : index
    %c0_2 = arith.constant 0 : index
    %2 = vector.load %arg4[%c0_1, %c0_2] : memref<32x3xf32, #tpu.memory_space<vmem>>, vector<32x3xf32>
    %3 = vector.extract_strided_slice %2 {offsets = [0, 0], sizes = [32, 1], strides = [1, 1]} : vector<32x3xf32> to vector<32x1xf32>
    %4 = vector.extract_strided_slice %2 {offsets = [0, 1], sizes = [32, 1], strides = [1, 1]} : vector<32x3xf32> to vector<32x1xf32>
    %5 = vector.extract_strided_slice %2 {offsets = [0, 2], sizes = [32, 1], strides = [1, 1]} : vector<32x3xf32> to vector<32x1xf32>
    %c0_3 = arith.constant 0 : index
    %c0_4 = arith.constant 0 : index
    %6 = vector.load %arg2[%c0_3, %c0_4] : memref<32x16xbf16, #tpu.memory_space<vmem>>, vector<32x16xbf16>
    %cst = arith.constant dense<0.000000e+00> : vector<32x8xf32>
    %7 = tpu.matmul %6, %1, %cst {dimension_numbers = #tpu.dot_dimension_numbers<[1], [1], [0], [0], [0, 0, 1, 0], [], []>} : vector<32x16xbf16>, vector<8x16xbf16>, vector<32x8xf32> -> vector<32x8xf32>
    %8 = vector.broadcast %3 : vector<32x1xf32> to vector<32x8xf32>
    %9 = arith.addf %7, %8 : vector<32x8xf32>
    %cst_5 = arith.constant 0.000000e+00 : f32
    %10 = vector.broadcast %cst_5 : f32 to vector<32x8xf32>
    %11 = arith.maximumf %9, %10 : vector<32x8xf32>
    %c0_6 = arith.constant 0 : index
    %c0_7 = arith.constant 0 : index
    %12 = vector.load %arg3[%c0_6, %c0_7] : memref<32x32xbf16, #tpu.memory_space<vmem>>, vector<32x32xbf16>
    %13 = arith.truncf %11 : vector<32x8xf32> to vector<32x8xbf16>
    %cst_8 = arith.constant dense<0.000000e+00> : vector<32x8xf32>
    %14 = tpu.matmul %12, %13, %cst_8 {dimension_numbers = #tpu.dot_dimension_numbers<[1], [0], [0], [1], [0, 0, 1, 1], [], []>} : vector<32x32xbf16>, vector<32x8xbf16>, vector<32x8xf32> -> vector<32x8xf32>
    %15 = vector.broadcast %4 : vector<32x1xf32> to vector<32x8xf32>
    %16 = arith.addf %14, %15 : vector<32x8xf32>
    %cst_9 = arith.constant 0.000000e+00 : f32
    %17 = vector.broadcast %cst_9 : f32 to vector<32x8xf32>
    %18 = arith.maximumf %16, %17 : vector<32x8xf32>
    %19 = vector.broadcast %5 : vector<32x1xf32> to vector<32x8xf32>
    %20 = arith.mulf %18, %19 : vector<32x8xf32>
    %cst_10 = arith.constant dense<0.000000e+00> : vector<8xf32>
    %21 = vector.multi_reduction <add>, %20, %cst_10 [0] : vector<32x8xf32> to vector<8xf32>
    %22 = vector.shape_cast %21 : vector<8xf32> to vector<1x8xf32>
    %c0_11 = arith.constant 0 : index
    %23 = memref.load %arg5[%c0_11] : memref<1xf32, #tpu.memory_space<smem>>
    %24 = vector.broadcast %23 : f32 to vector<1x8xf32>
    %25 = arith.addf %22, %24 : vector<1x8xf32>
    %c0_12 = arith.constant 0 : index
    %c0_13 = arith.constant 0 : index
    %26 = vector.load %arg6[%c0_12, %c0_13] : memref<1x8xf32, #tpu.memory_space<vmem>>, vector<1x8xf32>
    tpu.vector_store %arg6[%c0_12, %c0_13], %25 {strides = array<i32>} : memref<1x8xf32, #tpu.memory_space<vmem>>, vector<1x8xf32>,
    return
  }
  func.func @transform_0(%arg0: i32) -> (i32, i32) {
    %c0_i32 = arith.constant 0 : i32
    %c0_i32_0 = arith.constant 0 : i32
    return %arg0, %c0_i32 : i32, i32
  }
  func.func @transform_1(%arg0: i32) -> (i32, i32) {
    %c0_i32 = arith.constant 0 : i32
    %c0_i32_0 = arith.constant 0 : i32
    %c0_i32_1 = arith.constant 0 : i32
    return %c0_i32, %c0_i32_0 : i32, i32
  }
  func.func @transform_2(%arg0: i32) -> (i32, i32) {
    %c0_i32 = arith.constant 0 : i32
    %c0_i32_0 = arith.constant 0 : i32
    %c0_i32_1 = arith.constant 0 : i32
    return %c0_i32, %c0_i32_0 : i32, i32
  }
  func.func @transform_3(%arg0: i32) -> (i32, i32) {
    %c0_i32 = arith.constant 0 : i32
    %c0_i32_0 = arith.constant 0 : i32
    %c0_i32_1 = arith.constant 0 : i32
    return %c0_i32, %c0_i32_0 : i32, i32
  }
  func.func @transform_4(%arg0: i32) -> i32 {
    %c0_i32 = arith.constant 0 : i32
    %c0_i32_0 = arith.constant 0 : i32
    return %c0_i32 : i32
  }
  func.func @transform_5(%arg0: i32) -> (i32, i32) {
    %c0_i32 = arith.constant 0 : i32
    %c0_i32_0 = arith.constant 0 : i32
    return %c0_i32, %arg0 : i32, i32
  }
}

</mosaic_0001>

<llo_original>
// kernel: tpu_custom_call.1
$region0: #{tpu_custom_call.1}
  #allocation0 [shape = 'u32[]', space=smem, size = 0x4, offset = 0x4, fixed_abs, tag = 'smem constant byte address 0x4 - core index']
  #allocation1 [shape = 'u32[144,128]{1,0:T(1,128)}', space=vmem, size = 0x12000, scoped, tag = 'internal scratch']
  #allocation2 [shape = 'f32[1]{0:T(128)S(6)}', space=smem, size = 0x200, scoped, tag = 'scoped memory for tpu_custom_call.1']
  %s0 = inlined_call_operand.vmem [shape: f32[8,16], index: 0, kind: input, shape index: {}]
  %s1 = inlined_call_operand.vmem [shape: bf16[32,16], index: 1, kind: input, shape index: {}]
  %s2 = inlined_call_operand.vmem [shape: bf16[32,32], index: 2, kind: input, shape index: {}]
  %s3 = inlined_call_operand.vmem [shape: f32[32,3], index: 3, kind: input, shape index: {}]
  %s4 = inlined_call_operand.<no memory space> [shape: f32[1], index: 4, kind: input, shape index: {}]
  %s5 = inlined_call_operand.hbm [shape: f32[1,8], index: 5, kind: output, shape index: {}]
  %s6 = sld [smem:[#allocation0]]
  $region30: #{tpu_custom_call.1} parent=0
    _
  %s8 = ssub.s32 1, %s6
  %s9 = scalar_select 0, %s8, %s6
  %10 = sst [smem:[#allocation2]] %s4
  $region1: #{tpu_custom_call.1} parent=0
    #allocation3 [shape = 'u8[512]{0}', space=vmem, size = 0x400, scoped, tag = 'output window, operand 0, single buffered']
    #allocation4 [shape = 's32[1]{0}', space=sflag, size = 0x4, scoped, tag = 'scoped memory for tpu_custom_call.1']
    %11 = vsyncpa [#allocation4], 0
    // Predicated region
    $region2: #{tpu_custom_call.1} parent=1 // pred_check
      _
    $region3: #{tpu_custom_call.1} parent=1 // pred_check_branch
      %13 = sbr.rel (0) target = $region5
    $region4: #{tpu_custom_call.1} parent=1 // pred_region
      _
    $region5: #{tpu_custom_call.1} parent=1 // pred_fallthru
      _
    // Predicated region
    $region6: #{tpu_custom_call.1} parent=1 // pred_check
      _
    $region7: #{tpu_custom_call.1} parent=1 // pred_check_branch
      %15 = sbr.rel (0) target = $region9
    $region8: #{tpu_custom_call.1} parent=1 // pred_region
      _
    $region9: #{tpu_custom_call.1} parent=1 // pred_fallthru
      _
    // Predicated region
    $region10: #{tpu_custom_call.1} parent=1 // pred_check
      _
    $region11: #{tpu_custom_call.1} parent=1 // pred_check_branch
      %17 = sbr.rel (0) target = $region13
    $region12: #{tpu_custom_call.1} parent=1 // pred_region
      _
    $region13: #{tpu_custom_call.1} parent=1 // pred_fallthru
      _
    // Predicated region
    $region14: #{tpu_custom_call.1} parent=1 // pred_check
      _
    $region15: #{tpu_custom_call.1} parent=1 // pred_check_branch
      %19 = sbr.rel (0) target = $region17
    $region16: #{tpu_custom_call.1} parent=1 // pred_region
      _
    $region17: #{tpu_custom_call.1} parent=1 // pred_fallthru
      _
    // Predicated region
    $region18: #{tpu_custom_call.1} parent=1 // pred_check
      _
    $region19: #{tpu_custom_call.1} parent=1 // pred_check_branch
      %21 = sbr.rel (0) target = $region21
    $region20: #{tpu_custom_call.1} parent=1 // pred_region
      _
    $region21: #{tpu_custom_call.1} parent=1 // pred_fallthru
      _
    %v23 = vld [vmem:[%s0] sm:$0xff]
    %v24 = vpack.c.bf16 %v23, %v23
    %v25 = vld [vmem:[%s3] sm:$0xff]
    %v26 = vld [vmem:[%s3 + $0x8] sm:$0xff]
    %v27 = vld [vmem:[%s3 + $0x10] sm:$0xff]
    %v28 = vld [vmem:[%s3 + $0x18] sm:$0xff]
    %v29 = vld [vmem:[%s1] sm:$0xf]
    %v30 = vld [vmem:[%s1 + $0x4] sm:$0xf]
    %v31 = vld [vmem:[%s1 + $0x8] sm:$0xf]
    %v32 = vld [vmem:[%s1 + $0xc] sm:$0xf]
    %34 = vset.pattern.permute.xlu0 0
    %35 = vperm.xlu0 %34, %v25
    %v36 = vpop.permute.xlu0 %35
    %39 = vset.pattern.permute.xlu0 0
    %40 = vperm.xlu0 %39, %v26
    %v41 = vpop.permute.xlu0 %40
    %44 = vset.pattern.permute.xlu0 0
    %45 = vperm.xlu0 %44, %v27
    %v46 = vpop.permute.xlu0 %45
    %49 = vset.pattern.permute.xlu0 0
    %50 = vperm.xlu0 %49, %v28
    %v51 = vpop.permute.xlu0 %50
    %v57 = vunpack.c.l.b16 %v29
    %v58 = vunpack.c.l.b16 %v30
    %v59 = vunpack.c.l.b16 %v31
    %v60 = vunpack.c.l.b16 %v32
    %v61 = vpack.c.b16 %v58, %v57
    %v62 = vpack.c.b16 %v60, %v59
    %vm63 = vcmask 130048
    %v65 = vsel %vm63, %v61, 0
    %v68 = vsel %vm63, %v62, 0
    %v71 = vsel %vm63, %v24, 0
    %73 = vmatprep.subr.bf16.mxu0 0
    %74 = vmatpush1.bf16.xpose.msra.mxu0 %v71
    %75 = vmatprep.subr.bf16.mxu0 0
    %76 = vmatpush1.bf16.xpose.msra.mxu0 0
    %77 = vmatprep.subr.bf16.mxu0 0
    %78 = vmatpush1.bf16.xpose.msra.mxu0 0
    %79 = vmatprep.subr.bf16.mxu0 0
    %80 = vmatpush1.bf16.xpose.msra.mxu0 0
    %81 = vmatprep.subr.bf16.mxu0 0
    %82 = vmatpush1.bf16.xpose.msra.mxu0 0
    %83 = vmatprep.subr.bf16.mxu0 0
    %84 = vmatpush1.bf16.xpose.msra.mxu0 0
    %85 = vmatprep.subr.bf16.mxu0 0
    %86 = vmatpush1.bf16.xpose.msra.mxu0 0
    %87 = vmatprep.subr.bf16.mxu0 0
    %88 = vmatpush1.bf16.xpose.msra.mxu0 0
    %89 = vmatprep.subr.bf16.mxu0 0
    %90 = vmatpush1.bf16.xpose.msra.mxu0 0
    %91 = vmatprep.subr.bf16.mxu0 0
    %92 = vmatpush1.bf16.xpose.msra.mxu0 0
    %93 = vmatprep.subr.bf16.mxu0 0
    %94 = vmatpush1.bf16.xpose.msra.mxu0 0
    %95 = vmatprep.subr.bf16.mxu0 0
    %96 = vmatpush1.bf16.xpose.msra.mxu0 0
    %97 = vmatprep.subr.bf16.mxu0 0
    %98 = vmatpush1.bf16.xpose.msra.mxu0 0
    %99 = vmatprep.subr.bf16.mxu0 0
    %100 = vmatpush1.bf16.xpose.msra.mxu0 0
    %101 = vmatprep.subr.bf16.mxu0 0
    %102 = vmatpush1.bf16.xpose.msra.mxu0 0
    %103 = vmatprep.subr.bf16.mxu0 0
    %104 = vmatpush1.bf16.xpose.msra.mxu0 0
    %105 = vmatprep.mubr.bf16.mxu0 0
    %106 = vmatmul.mubr.bf16.gmra.mrb[0].mxu0 %v65
    %v107 = vpop.f32.mrb[0].mxu0
    %v108 = vadd.f32 %v36, %v107
    %v109 = vpop.f32.mrb[0].mxu0
    %v110 = vpop.f32.mrb[0].mxu0
    %v111 = vadd.f32 %v41, %v110
    %v112 = vpop.f32.mrb[0].mxu0
    %113 = vmatprep.mubr.bf16.mxu0 0
    %114 = vmatmul.mubr.bf16.gmra.mrb[0].mxu0 %v68
    %v115 = vpop.f32.mrb[0].mxu0
    %v116 = vadd.f32 %v46, %v115
    %v117 = vpop.f32.mrb[0].mxu0
    %v118 = vpop.f32.mrb[0].mxu0
    %v119 = vadd.f32 %v51, %v118
    %v120 = vpop.f32.mrb[0].mxu0
    %121 = vdwg.mxu0
    %v122 = vmax.f32 %v108, 0.0
    %v123 = vmax.f32 %v111, 0.0
    %v124 = vmax.f32 %v116, 0.0
    %v125 = vmax.f32 %v119, 0.0
    %v126 = vld [vmem:[%s2] sm:$0xf]
    %v127 = vld [vmem:[%s2 + $0x4] sm:$0xf]
    %v128 = vld [vmem:[%s2 + $0x8] sm:$0xf]
    %v129 = vld [vmem:[%s2 + $0xc] sm:$0xf]
    %v130 = vpack.c.bf16 %v123, %v122
    %v131 = vpack.c.bf16 %v125, %v124
    %132 = vset.pattern.permute.xlu0 1
    %133 = vperm.xlu0 %132, %v25
    %v134 = vpop.permute.xlu0 %133
    %136 = vset.pattern.permute.xlu0 1
    %137 = vperm.xlu0 %136, %v26
    %v138 = vpop.permute.xlu0 %137
    %140 = vset.pattern.permute.xlu0 1
    %141 = vperm.xlu0 %140, %v27
    %v142 = vpop.permute.xlu0 %141
    %144 = vset.pattern.permute.xlu0 1
    %145 = vperm.xlu0 %144, %v28
    %v146 = vpop.permute.xlu0 %145
    %v152 = vunpack.c.l.b16 %v126
    %v153 = vunpack.c.l.b16 %v127
    %v154 = vunpack.c.l.b16 %v128
    %v155 = vunpack.c.l.b16 %v129
    %v156 = vpack.c.b16 %v153, %v152
    %v157 = vpack.c.b16 %v155, %v154
    %vm158 = vcmask 261120
    %v160 = vsel %vm158, %v156, 0
    %v163 = vsel %vm158, %v157, 0
    %165 = vmatprep.subr.bf16.mxu0 0
    %166 = vmatpush1.bf16.msra.mxu0 %v130
    %167 = vmatprep.subr.bf16.mxu0 0
    %168 = vmatpush1.bf16.msra.mxu0 %v131
    %169 = vmatprep.subr.bf16.mxu0 0
    %170 = vmatpush1.bf16.msra.mxu0 0
    %171 = vmatprep.subr.bf16.mxu0 0
    %172 = vmatpush1.bf16.msra.mxu0 0
    %173 = vmatprep.subr.bf16.mxu0 0
    %174 = vmatpush1.bf16.msra.mxu0 0
    %175 = vmatprep.subr.bf16.mxu0 0
    %176 = vmatpush1.bf16.msra.mxu0 0
    %177 = vmatprep.subr.bf16.mxu0 0
    %178 = vmatpush1.bf16.msra.mxu0 0
    %179 = vmatprep.subr.bf16.mxu0 0
    %180 = vmatpush1.bf16.msra.mxu0 0
    %181 = vmatprep.subr.bf16.mxu0 0
    %182 = vmatpush1.bf16.msra.mxu0 0
    %183 = vmatprep.subr.bf16.mxu0 0
    %184 = vmatpush1.bf16.msra.mxu0 0
    %185 = vmatprep.subr.bf16.mxu0 0
    %186 = vmatpush1.bf16.msra.mxu0 0
    %187 = vmatprep.subr.bf16.mxu0 0
    %188 = vmatpush1.bf16.msra.mxu0 0
    %189 = vmatprep.subr.bf16.mxu0 0
    %190 = vmatpush1.bf16.msra.mxu0 0
    %191 = vmatprep.subr.bf16.mxu0 0
    %192 = vmatpush1.bf16.msra.mxu0 0
    %193 = vmatprep.subr.bf16.mxu0 0
    %194 = vmatpush1.bf16.msra.mxu0 0
    %195 = vmatprep.subr.bf16.mxu0 0
    %196 = vmatpush1.bf16.msra.mxu0 0
    %197 = vmatprep.mubr.bf16.mxu0 0
    %198 = vmatmul.mubr.bf16.gmra.mrb[0].mxu0 %v160
    %v199 = vpop.f32.mrb[0].mxu0
    %v200 = vadd.f32 %v134, %v199
    %v201 = vpop.f32.mrb[0].mxu0
    %v202 = vpop.f32.mrb[0].mxu0
    %v203 = vadd.f32 %v138, %v202
    %v204 = vpop.f32.mrb[0].mxu0
    %205 = vmatprep.mubr.bf16.mxu0 0
    %206 = vmatmul.mubr.bf16.gmra.mrb[0].mxu0 %v163
    %v207 = vpop.f32.mrb[0].mxu0
    %v208 = vadd.f32 %v142, %v207
    %v209 = vpop.f32.mrb[0].mxu0
    %v210 = vpop.f32.mrb[0].mxu0
    %v211 = vadd.f32 %v146, %v210
    %v212 = vpop.f32.mrb[0].mxu0
    %213 = vdwg.mxu0
    %v214 = vmax.f32 %v200, 0.0
    %v215 = vmax.f32 %v203, 0.0
    %v216 = vmax.f32 %v208, 0.0
    %v217 = vmax.f32 %v211, 0.0
    %218 = vset.pattern.permute.xlu0 2
    %219 = vperm.xlu0 %218, %v25
    %v220 = vpop.permute.xlu0 %219
    %222 = vset.pattern.permute.xlu0 2
    %223 = vperm.xlu0 %222, %v26
    %v224 = vpop.permute.xlu0 %223
    %226 = vset.pattern.permute.xlu0 2
    %227 = vperm.xlu0 %226, %v27
    %v228 = vpop.permute.xlu0 %227
    %230 = vset.pattern.permute.xlu0 2
    %231 = vperm.xlu0 %230, %v28
    %v232 = vpop.permute.xlu0 %231
    %v234 = vmul.f32 %v214, %v220
    %v235 = vmul.f32 %v215, %v224
    %v236 = vmul.f32 %v216, %v228
    %v237 = vmul.f32 %v217, %v232
    %vm238 = vcmask 64512
    %v239 = vsel %vm238, %v234, 0.0
    %v240 = vsel %vm238, %v235, 0.0
    %v241 = vadd.f32 %v239, %v240
    %v242 = vsel %vm238, %v236, 0.0
    %v243 = vadd.f32 %v241, %v242
    %v244 = vsel %vm238, %v237, 0.0
    %v245 = vadd.f32 %v243, %v244
    %v246 = vrot.slane %v245, 4
    %v247 = vadd.f32 %v245, %v246
    %v248 = vrot.slane %v247, 2
    %v249 = vadd.f32 %v247, %v248
    %v250 = vrot.slane %v249, 1
    %v251 = vadd.f32 %v249, %v250
    %s252 = sld [smem:[#allocation2]]
    %v253 = vstv %s252
    %v254 = vadd.f32 %v251, %v253
    %vm255 = vcmask 57344
    %256 = vst.msk [vmem:[#allocation3] sm:$0x1] %vm255, %v254
    // Predicated region
    $region22: #{tpu_custom_call.1} parent=1 // pred_check
      _
    $region23: #{tpu_custom_call.1} parent=1 // pred_check_branch
      %258 = sbr.rel (0) target = $region25
    $region24: #{tpu_custom_call.1} parent=1 // pred_region
      %s260 = ssub.s32 16, 16
      %261 = vsyncadd [#allocation4], %s260
      %s263 = sshll.u32 [#allocation3], 4
      %s264 = int_to_ptr.vmem [resolvable:$true] %s263
      %266 = dma.vmem_to_hbm [thread:$0]  %s264, 16, %s5, [#allocation4]
    $region25: #{tpu_custom_call.1} parent=1 // pred_fallthru
      _
    // Predicated region
    $region26: #{tpu_custom_call.1} parent=1 // pred_check
      _
    $region27: #{tpu_custom_call.1} parent=1 // pred_check_branch
      %268 = sbr.rel (0) target = $region29
    $region28: #{tpu_custom_call.1} parent=1 // pred_region
      %269 = dma.done [#allocation4], 16
    $region29: #{tpu_custom_call.1} parent=1 // pred_fallthru
      _
    %270 = vsyncpa [#allocation4], 1

// kernel: tpu_custom_call.1
$region0: #{tpu_custom_call.1}
  #allocation0 [shape = 'u32[]', space=smem, size = 0x4, offset = 0x4, fixed_abs, tag = 'smem constant byte address 0x4 - core index']
  #allocation1 [shape = 'u32[144,128]{1,0:T(1,128)}', space=vmem, size = 0x12000, scoped, tag = 'internal scratch']
  #allocation2 [shape = 'f32[1]{0:T(128)S(6)}', space=smem, size = 0x200, scoped, tag = 'scoped memory for tpu_custom_call.1']
  %s0 = inlined_call_operand.vmem [shape: f32[8,16], index: 0, kind: input, shape index: {}]
  %s1 = inlined_call_operand.vmem [shape: bf16[32,16], index: 1, kind: input, shape index: {}]
  %s2 = inlined_call_operand.vmem [shape: bf16[32,32], index: 2, kind: input, shape index: {}]
  %s3 = inlined_call_operand.vmem [shape: f32[32,3], index: 3, kind: input, shape index: {}]
  %s4 = inlined_call_operand.<no memory space> [shape: f32[1], index: 4, kind: input, shape index: {}]
  %s5 = inlined_call_operand.hbm [shape: f32[1,8], index: 5, kind: output, shape index: {}]
  %s6 = sld [smem:[#allocation0]]
  $region30: #{tpu_custom_call.1} parent=0
    _
  %s8 = ssub.s32 1, %s6
  %s9 = scalar_select 0, %s8, %s6
  %10 = sst [smem:[#allocation2]] %s4
  $region1: #{tpu_custom_call.1} parent=0
    #allocation3 [shape = 'u8[512]{0}', space=vmem, size = 0x400, scoped, tag = 'output window, operand 0, single buffered']
    #allocation4 [shape = 's32[1]{0}', space=sflag, size = 0x4, scoped, tag = 'scoped memory for tpu_custom_call.1']
    %11 = vsyncpa [#allocation4], 0
    // Predicated region
    $region2: #{tpu_custom_call.1} parent=1 // pred_check
      _
    $region3: #{tpu_custom_call.1} parent=1 // pred_check_branch
      %13 = sbr.rel (0) target = $region5
    $region4: #{tpu_custom_call.1} parent=1 // pred_region
      _
    $region5: #{tpu_custom_call.1} parent=1 // pred_fallthru
      _
    // Predicated region
    $region6: #{tpu_custom_call.1} parent=1 // pred_check
      _
    $region7: #{tpu_custom_call.1} parent=1 // pred_check_branch
      %15 = sbr.rel (0) target = $region9
    $region8: #{tpu_custom_call.1} parent=1 // pred_region
      _
    $region9: #{tpu_custom_call.1} parent=1 // pred_fallthru
      _
    // Predicated region
    $region10: #{tpu_custom_call.1} parent=1 // pred_check
      _
    $region11: #{tpu_custom_call.1} parent=1 // pred_check_branch
      %17 = sbr.rel (0) target = $region13
    $region12: #{tpu_custom_call.1} parent=1 // pred_region
      _
    $region13: #{tpu_custom_call.1} parent=1 // pred_fallthru
      _
    // Predicated region
    $region14: #{tpu_custom_call.1} parent=1 // pred_check
      _
    $region15: #{tpu_custom_call.1} parent=1 // pred_check_branch
      %19 = sbr.rel (0) target = $region17
    $region16: #{tpu_custom_call.1} parent=1 // pred_region
      _
    $region17: #{tpu_custom_call.1} parent=1 // pred_fallthru
      _
    // Predicated region
    $region18: #{tpu_custom_call.1} parent=1 // pred_check
      _
    $region19: #{tpu_custom_call.1} parent=1 // pred_check_branch
      %21 = sbr.rel (0) target = $region21
    $region20: #{tpu_custom_call.1} parent=1 // pred_region
      _
    $region21: #{tpu_custom_call.1} parent=1 // pred_fallthru
      _
    %v23 = vld [vmem:[%s0] sm:$0xff]
    %v24 = vpack.c.bf16 %v23, %v23
    %v25 = vld [vmem:[%s3] sm:$0xff]
    %v26 = vld [vmem:[%s3 + $0x8] sm:$0xff]
    %v27 = vld [vmem:[%s3 + $0x10] sm:$0xff]
    %v28 = vld [vmem:[%s3 + $0x18] sm:$0xff]
    %v29 = vld [vmem:[%s1] sm:$0xf]
    %v30 = vld [vmem:[%s1 + $0x4] sm:$0xf]
    %v31 = vld [vmem:[%s1 + $0x8] sm:$0xf]
    %v32 = vld [vmem:[%s1 + $0xc] sm:$0xf]
    %34 = vset.pattern.permute.xlu0 0
    %35 = vperm.xlu0 %34, %v25
    %v36 = vpop.permute.xlu0 %35
    %39 = vset.pattern.permute.xlu0 0
    %40 = vperm.xlu0 %39, %v26
    %v41 = vpop.permute.xlu0 %40
    %44 = vset.pattern.permute.xlu0 0
    %45 = vperm.xlu0 %44, %v27
    %v46 = vpop.permute.xlu0 %45
    %49 = vset.pattern.permute.xlu0 0
    %50 = vperm.xlu0 %49, %v28
    %v51 = vpop.permute.xlu0 %50
    %v57 = vunpack.c.l.b16 %v29
    %v58 = vunpack.c.l.b16 %v30
    %v59 = vunpack.c.l.b16 %v31
    %v60 = vunpack.c.l.b16 %v32
    %v61 = vpack.c.b16 %v58, %v57
    %v62 = vpack.c.b16 %v60, %v59
    %vm63 = vcmask 130048
    %v65 = vsel %vm63, %v61, 0
    %v68 = vsel %vm63, %v62, 0
    %v71 = vsel %vm63, %v24, 0
    %73 = vmatprep.subr.bf16.mxu0 0
    %74 = vmatpush1.bf16.xpose.msra.mxu0 %v71
    %75 = vmatprep.subr.bf16.mxu0 0
    %76 = vmatpush1.bf16.xpose.msra.mxu0 0
    %77 = vmatprep.subr.bf16.mxu0 0
    %78 = vmatpush1.bf16.xpose.msra.mxu0 0
    %79 = vmatprep.subr.bf16.mxu0 0
    %80 = vmatpush1.bf16.xpose.msra.mxu0 0
    %81 = vmatprep.subr.bf16.mxu0 0
    %82 = vmatpush1.bf16.xpose.msra.mxu0 0
    %83 = vmatprep.subr.bf16.mxu0 0
    %84 = vmatpush1.bf16.xpose.msra.mxu0 0
    %85 = vmatprep.subr.bf16.mxu0 0
    %86 = vmatpush1.bf16.xpose.msra.mxu0 0
    %87 = vmatprep.subr.bf16.mxu0 0
    %88 = vmatpush1.bf16.xpose.msra.mxu0 0
    %89 = vmatprep.subr.bf16.mxu0 0
    %90 = vmatpush1.bf16.xpose.msra.mxu0 0
    %91 = vmatprep.subr.bf16.mxu0 0
    %92 = vmatpush1.bf16.xpose.msra.mxu0 0
    %93 = vmatprep.subr.bf16.mxu0 0
    %94 = vmatpush1.bf16.xpose.msra.mxu0 0
    %95 = vmatprep.subr.bf16.mxu0 0
    %96 = vmatpush1.bf16.xpose.msra.mxu0 0
    %97 = vmatprep.subr.bf16.mxu0 0
    %98 = vmatpush1.bf16.xpose.msra.mxu0 0
    %99 = vmatprep.subr.bf16.mxu0 0
    %100 = vmatpush1.bf16.xpose.msra.mxu0 0
    %101 = vmatprep.subr.bf16.mxu0 0
    %102 = vmatpush1.bf16.xpose.msra.mxu0 0
    %103 = vmatprep.subr.bf16.mxu0 0
    %104 = vmatpush1.bf16.xpose.msra.mxu0 0
    %105 = vmatprep.mubr.bf16.mxu0 0
    %106 = vmatmul.mubr.bf16.gmra.mrb[0].mxu0 %v65
    %v107 = vpop.f32.mrb[0].mxu0
    %v108 = vadd.f32 %v36, %v107
    %v109 = vpop.f32.mrb[0].mxu0
    %v110 = vpop.f32.mrb[0].mxu0
    %v111 = vadd.f32 %v41, %v110
    %v112 = vpop.f32.mrb[0].mxu0
    %113 = vmatprep.mubr.bf16.mxu0 0
    %114 = vmatmul.mubr.bf16.gmra.mrb[0].mxu0 %v68
    %v115 = vpop.f32.mrb[0].mxu0
    %v116 = vadd.f32 %v46, %v115
    %v117 = vpop.f32.mrb[0].mxu0
    %v118 = vpop.f32.mrb[0].mxu0
    %v119 = vadd.f32 %v51, %v118
    %v120 = vpop.f32.mrb[0].mxu0
    %121 = vdwg.mxu0
    %v122 = vmax.f32 %v108, 0.0
    %v123 = vmax.f32 %v111, 0.0
    %v124 = vmax.f32 %v116, 0.0
    %v125 = vmax.f32 %v119, 0.0
    %v126 = vld [vmem:[%s2] sm:$0xf]
    %v127 = vld [vmem:[%s2 + $0x4] sm:$0xf]
    %v128 = vld [vmem:[%s2 + $0x8] sm:$0xf]
    %v129 = vld [vmem:[%s2 + $0xc] sm:$0xf]
    %v130 = vpack.c.bf16 %v123, %v122
    %v131 = vpack.c.bf16 %v125, %v124
    %132 = vset.pattern.permute.xlu0 1
    %133 = vperm.xlu0 %132, %v25
    %v134 = vpop.permute.xlu0 %133
    %136 = vset.pattern.permute.xlu0 1
    %137 = vperm.xlu0 %136, %v26
    %v138 = vpop.permute.xlu0 %137
    %140 = vset.pattern.permute.xlu0 1
    %141 = vperm.xlu0 %140, %v27
    %v142 = vpop.permute.xlu0 %141
    %144 = vset.pattern.permute.xlu0 1
    %145 = vperm.xlu0 %144, %v28
    %v146 = vpop.permute.xlu0 %145
    %v152 = vunpack.c.l.b16 %v126
    %v153 = vunpack.c.l.b16 %v127
    %v154 = vunpack.c.l.b16 %v128
    %v155 = vunpack.c.l.b16 %v129
    %v156 = vpack.c.b16 %v153, %v152
    %v157 = vpack.c.b16 %v155, %v154
    %vm158 = vcmask 261120
    %v160 = vsel %vm158, %v156, 0
    %v163 = vsel %vm158, %v157, 0
    %165 = vmatprep.subr.bf16.mxu0 0
    %166 = vmatpush1.bf16.msra.mxu0 %v130
    %167 = vmatprep.subr.bf16.mxu0 0
    %168 = vmatpush1.bf16.msra.mxu0 %v131
    %169 = vmatprep.subr.bf16.mxu0 0
    %170 = vmatpush1.bf16.msra.mxu0 0
    %171 = vmatprep.subr.bf16.mxu0 0
    %172 = vmatpush1.bf16.msra.mxu0 0
    %173 = vmatprep.subr.bf16.mxu0 0
    %174 = vmatpush1.bf16.msra.mxu0 0
    %175 = vmatprep.subr.bf16.mxu0 0
    %176 = vmatpush1.bf16.msra.mxu0 0
    %177 = vmatprep.subr.bf16.mxu0 0
    %178 = vmatpush1.bf16.msra.mxu0 0
    %179 = vmatprep.subr.bf16.mxu0 0
    %180 = vmatpush1.bf16.msra.mxu0 0
    %181 = vmatprep.subr.bf16.mxu0 0
    %182 = vmatpush1.bf16.msra.mxu0 0
    %183 = vmatprep.subr.bf16.mxu0 0
    %184 = vmatpush1.bf16.msra.mxu0 0
    %185 = vmatprep.subr.bf16.mxu0 0
    %186 = vmatpush1.bf16.msra.mxu0 0
    %187 = vmatprep.subr.bf16.mxu0 0
    %188 = vmatpush1.bf16.msra.mxu0 0
    %189 = vmatprep.subr.bf16.mxu0 0
    %190 = vmatpush1.bf16.msra.mxu0 0
    %191 = vmatprep.subr.bf16.mxu0 0
    %192 = vmatpush1.bf16.msra.mxu0 0
    %193 = vmatprep.subr.bf16.mxu0 0
    %194 = vmatpush1.bf16.msra.mxu0 0
    %195 = vmatprep.subr.bf16.mxu0 0
    %196 = vmatpush1.bf16.msra.mxu0 0
    %197 = vmatprep.mubr.bf16.mxu0 0
    %198 = vmatmul.mubr.bf16.gmra.mrb[0].mxu0 %v160
    %v199 = vpop.f32.mrb[0].mxu0
    %v200 = vadd.f32 %v134, %v199
    %v201 = vpop.f32.mrb[0].mxu0
    %v202 = vpop.f32.mrb[0].mxu0
    %v203 = vadd.f32 %v138, %v202
    %v204 = vpop.f32.mrb[0].mxu0
    %205 = vmatprep.mubr.bf16.mxu0 0
    %206 = vmatmul.mubr.bf16.gmra.mrb[0].mxu0 %v163
    %v207 = vpop.f32.mrb[0].mxu0
    %v208 = vadd.f32 %v142, %v207
    %v209 = vpop.f32.mrb[0].mxu0
    %v210 = vpop.f32.mrb[0].mxu0
    %v211 = vadd.f32 %v146, %v210
    %v212 = vpop.f32.mrb[0].mxu0
    %213 = vdwg.mxu0
    %v214 = vmax.f32 %v200, 0.0
    %v215 = vmax.f32 %v203, 0.0
    %v216 = vmax.f32 %v208, 0.0
    %v217 = vmax.f32 %v211, 0.0
    %218 = vset.pattern.permute.xlu0 2
    %219 = vperm.xlu0 %218, %v25
    %v220 = vpop.permute.xlu0 %219
    %222 = vset.pattern.permute.xlu0 2
    %223 = vperm.xlu0 %222, %v26
    %v224 = vpop.permute.xlu0 %223
    %226 = vset.pattern.permute.xlu0 2
    %227 = vperm.xlu0 %226, %v27
    %v228 = vpop.permute.xlu0 %227
    %230 = vset.pattern.permute.xlu0 2
    %231 = vperm.xlu0 %230, %v28
    %v232 = vpop.permute.xlu0 %231
    %v234 = vmul.f32 %v214, %v220
    %v235 = vmul.f32 %v215, %v224
    %v236 = vmul.f32 %v216, %v228
    %v237 = vmul.f32 %v217, %v232
    %vm238 = vcmask 64512
    %v239 = vsel %vm238, %v234, 0.0
    %v240 = vsel %vm238, %v235, 0.0
    %v241 = vadd.f32 %v239, %v240
    %v242 = vsel %vm238, %v236, 0.0
    %v243 = vadd.f32 %v241, %v242
    %v244 = vsel %vm238, %v237, 0.0
    %v245 = vadd.f32 %v243, %v244
    %v246 = vrot.slane %v245, 4
    %v247 = vadd.f32 %v245, %v246
    %v248 = vrot.slane %v247, 2
    %v249 = vadd.f32 %v247, %v248
    %v250 = vrot.slane %v249, 1
    %v251 = vadd.f32 %v249, %v250
    %s252 = sld [smem:[#allocation2]]
    %v253 = vstv %s252
    %v254 = vadd.f32 %v251, %v253
    %vm255 = vcmask 57344
    %256 = vst.msk [vmem:[#allocation3] sm:$0x1] %vm255, %v254
    // Predicated region
    $region22: #{tpu_custom_call.1} parent=1 // pred_check
      _
    $region23: #{tpu_custom_call.1} parent=1 // pred_check_branch
      %258 = sbr.rel (0) target = $region25
    $region24: #{tpu_custom_call.1} parent=1 // pred_region
      %s260 = ssub.s32 16, 16
      %261 = vsyncadd [#allocation4], %s260
      %s263 = sshll.u32 [#allocation3], 4
      %s264 = int_to_ptr.vmem [resolvable:$true] %s263
      %266 = dma.vmem_to_hbm [thread:$0]  %s264, 16, %s5, [#allocation4]
    $region25: #{tpu_custom_call.1} parent=1 // pred_fallthru
      _
    // Predicated region
    $region26: #{tpu_custom_call.1} parent=1 // pred_check
      _
    $region27: #{tpu_custom_call.1} parent=1 // pred_check_branch
      %268 = sbr.rel (0) target = $region29
    $region28: #{tpu_custom_call.1} parent=1 // pred_region
      %269 = dma.done [#allocation4], 16
    $region29: #{tpu_custom_call.1} parent=1 // pred_fallthru
      _
    %270 = vsyncpa [#allocation4], 1

</llo_original>
